<compile_context>
chip_gen: v6e
topology: v6e:2x2x1
jax: 0.10.0
libtpu: 0.0.40
codegen_flags: <defaults>
</compile_context>

<pallas_src>
import jax
import jax.numpy as jnp
from jax.experimental import pallas as pl
from jax.experimental.pallas import tpu as pltpu

EPS = 1e-5
NEG_SLOPE = 0.01  # F.leaky_relu default


def make_resblock_kernel(B, L):
    inv_n = 1.0 / float(B * L)

    def kernel(x_ref, w_ref, p_ref, o_ref):
        C, BL = x_ref.shape
        x = x_ref[...]                                      # (C, B*L) f32

        # Lane-only sequence-boundary masks: one (1, BL) row, broadcast over C.
        col = jax.lax.broadcasted_iota(jnp.int32, (1, BL), 1) % L
        left_ok = col != 0              # l == 0 has no left neighbour
        right_ok = col != (L - 1)       # l == L-1 has no right neighbour

        zero_col = jnp.zeros((C, 1), jnp.float32)

        def lrelu(v):
            return jnp.where(v >= 0, v, NEG_SLOPE * v)

        def conv(inp, ci):
            # left[p] = inp[p-1], right[p] = inp[p+1]; zeros at sequence edges.
            left = jnp.where(
                left_ok,
                jnp.concatenate([zero_col, inp[:, :BL - 1]], axis=1), 0.0)
            right = jnp.where(
                right_ok,
                jnp.concatenate([inp[:, 1:], zero_col], axis=1), 0.0)
            # One fused MXU dot: (C, 3C) x (3C, BL), bf16 operands, f32 acc.
            # (Conv bias dropped: it is exactly cancelled by the batch-stat BN
            #  mean subtraction that follows.)
            taps = jnp.concatenate([left, inp, right],
                                   axis=0).astype(jnp.bfloat16)
            return jnp.dot(w_ref[ci], taps,
                           preferred_element_type=jnp.float32)

        def bn(inp, ci):
            # Training-mode BN: per-channel stats over (batch, length), i.e. a
            # single lane-axis reduction.  sum and sum-sq in one pass.
            s1 = jnp.sum(inp, axis=1, keepdims=True)
            s2 = jnp.sum(inp * inp, axis=1, keepdims=True)
            mean = s1 * inv_n
            var = s2 * inv_n - mean * mean
            g = p_ref[:, 2 * ci:2 * ci + 1]                 # (C, 1)
            b = p_ref[:, 2 * ci + 1:2 * ci + 2]             # (C, 1)
            scale = jax.lax.rsqrt(var + EPS) * g            # column * column
            return (inp - mean) * scale + b

        h = lrelu(bn(conv(x, 0), 0))
        h = bn(conv(h, 1), 1)
        o_ref[...] = lrelu(x + h)

    return kernel


def resblock_pallas(x, params):
    B, C, L = x.shape
    (w1, b1, g1, be1, w2, b2, g2, be2) = params
    del b1, b2  # conv biases are mathematically dead under batch-stat BN
    f32 = jnp.float32

    # Lane-dense activation slab: (C, B*L), batch folded into the lane axis.
    x2d = x.astype(f32).transpose(1, 0, 2).reshape(C, B * L)

    # Fused-tap conv weights: (2, C, 3C) bf16; column blocks = taps 0,1,2
    # (matching the kernel's [left, center, right] tap-slab ordering).
    def cat_taps(w):  # (C_out, C_in, 3) -> (C_out, 3*C_in)
        return jnp.concatenate([w[:, :, 0], w[:, :, 1], w[:, :, 2]], axis=1)

    w_all = jnp.stack([cat_taps(w1), cat_taps(w2)],
                      axis=0).astype(jnp.bfloat16)

    # Per-channel BN affine params: columns = [g1, be1, g2, be2] -> (C, 4).
    p_all = jnp.stack([g1, be1, g2, be2], axis=1).astype(f32)

    vspec = pl.BlockSpec(memory_space=pltpu.MemorySpace.VMEM)
    out2d = pl.pallas_call(
        make_resblock_kernel(B, L),
        out_shape=jax.ShapeDtypeStruct((C, B * L), f32),
        in_specs=[vspec, vspec, vspec],
        out_specs=vspec,
        compiler_params=pltpu.CompilerParams(
            vmem_limit_bytes=32 * 1024 * 1024),
    )(x2d, w_all, p_all)

    # TODO(synk): at production C / B*L, tile the B*L axis on sequence
    # boundaries with a grid ("parallel" axis for v7x dual-TC, tile width a
    # multiple of 256 lanes, roughly half-size tiles on v7x's 64 MiB VMEM),
    # use a two-pass BN (per-tile partial sum/sum-sq, then normalize), and
    # switch the tap shifts to pltpu.roll on lane-aligned tiles.
    return out2d.reshape(C, B, L).transpose(1, 0, 2)


def resblock_reference(x, params):
    (w1, b1, g1, be1, w2, b2, g2, be2) = params

    def conv1d(h, w, b):
        y = jax.lax.conv_general_dilated(
            h, w, window_strides=(1,), padding=((1, 1),),
            dimension_numbers=('NCH', 'OIH', 'NCH'))
        return y + b[None, :, None]

    def bn(h, g, be):
        mean = h.mean(axis=(0, 2), keepdims=True)
        var = ((h - mean) ** 2).mean(axis=(0, 2), keepdims=True)
        return ((h - mean) / jnp.sqrt(var + EPS) * g[None, :, None]
                + be[None, :, None])

    def lrelu(v):
        return jnp.where(v >= 0, v, NEG_SLOPE * v)

    h = lrelu(bn(conv1d(x, w1, b1), g1, be1))
    h = bn(conv1d(h, w2, b2), g2, be2)
    return lrelu(x + h)


if __name__ == "__main__":
    B, C, L = 2, 4, 16  # batch=2, nf=4 channels, seq length=16
    key = jax.random.PRNGKey(0)
    ks = jax.random.split(key, 9)

    x = jax.random.normal(ks[0], (B, C, L), dtype=jnp.float32)
    w1 = 0.1 * jax.random.normal(ks[1], (C, C, 3), dtype=jnp.float32)
    b1 = 0.05 * jax.random.normal(ks[2], (C,), dtype=jnp.float32)
    w2 = 0.1 * jax.random.normal(ks[3], (C, C, 3), dtype=jnp.float32)
    b2 = 0.05 * jax.random.normal(ks[4], (C,), dtype=jnp.float32)
    g1 = 1.0 + 0.1 * jax.random.normal(ks[5], (C,), dtype=jnp.float32)
    be1 = 0.1 * jax.random.normal(ks[6], (C,), dtype=jnp.float32)
    g2 = 1.0 + 0.1 * jax.random.normal(ks[7], (C,), dtype=jnp.float32)
    be2 = 0.1 * jax.random.normal(ks[8], (C,), dtype=jnp.float32)

    params = (w1, b1, g1, be1, w2, b2, g2, be2)

    out = resblock_pallas(x, params)
    out = jax.block_until_ready(out)

    ref = jax.block_until_ready(resblock_reference(x, params))
    assert out.shape == (B, C, L)
    # Tolerance loosened vs the pure-f32 version: conv matmul operands are
    # bf16 (f32 accumulation); BN stats and elementwise math remain f32.
    max_err = float(jnp.max(jnp.abs(out - ref)))
    assert jnp.allclose(out, ref, atol=5e-2, rtol=5e-2), (
        f"max abs err {max_err}")

    print("KERNEL_OK")
</pallas_src>

<mosaic_0001>
module attributes {stable_mosaic.version = 11 : i64} {
  func.func @kernel(%arg0: memref<4x32xf32, #tpu.memory_space<vmem>>, %arg1: memref<2x4x12xbf16, #tpu.memory_space<vmem>>, %arg2: memref<4x4xf32, #tpu.memory_space<vmem>>, %arg3: memref<4x32xf32, #tpu.memory_space<vmem>>) attributes {dimension_semantics = [], scalar_prefetch = 0 : i64, scratch_operands = 0 : i64, tpu.core_type = #tpu.core_type<tc>} {
    %c0 = arith.constant 0 : index
    %c0_0 = arith.constant 0 : index
    %0 = vector.load %arg0[%c0, %c0_0] : memref<4x32xf32, #tpu.memory_space<vmem>>, vector<4x32xf32>
    %1 = tpu.iota {dimensions = array<i32: 1>} : vector<1x32xi32>
    %c16_i32 = arith.constant 16 : i32
    %c0_i32 = arith.constant 0 : i32
    %2 = arith.cmpi eq, %c16_i32, %c0_i32 : i32
    %c1_i32 = arith.constant 1 : i32
    %3 = arith.select %2, %c1_i32, %c16_i32 : i32
    %4 = vector.broadcast %3 : i32 to vector<1x32xi32>
    %5 = arith.remsi %1, %4 : vector<1x32xi32>
    %c0_i32_1 = arith.constant 0 : i32
    %6 = vector.broadcast %c0_i32_1 : i32 to vector<1x32xi32>
    %7 = arith.cmpi ne, %5, %6 : vector<1x32xi32>
    %c0_i32_2 = arith.constant 0 : i32
    %8 = vector.broadcast %c0_i32_2 : i32 to vector<1x32xi32>
    %9 = arith.cmpi slt, %5, %8 : vector<1x32xi32>
    %c0_i32_3 = arith.constant 0 : i32
    %10 = arith.cmpi slt, %3, %c0_i32_3 : i32
    %11 = vector.broadcast %10 : i1 to vector<1x32xi1>
    %12 = vector.broadcast %11 : vector<1x32xi1> to vector<1x32xi1>
    %13 = arith.xori %9, %12 : vector<1x32xi1>
    %14 = arith.andi %13, %7 : vector<1x32xi1>
    %15 = vector.broadcast %3 : i32 to vector<1x32xi32>
    %16 = arith.addi %5, %15 : vector<1x32xi32>
    %17 = arith.select %14, %16, %5 : vector<1x32xi1>, vector<1x32xi32>
    %c0_i32_4 = arith.constant 0 : i32
    %18 = vector.broadcast %c0_i32_4 : i32 to vector<1x32xi32>
    %19 = arith.cmpi ne, %17, %18 : vector<1x32xi32>
    %c15_i32 = arith.constant 15 : i32
    %20 = vector.broadcast %c15_i32 : i32 to vector<1x32xi32>
    %21 = arith.cmpi ne, %17, %20 : vector<1x32xi32>
    %cst = arith.constant 0.000000e+00 : f32
    %22 = vector.broadcast %cst : f32 to vector<4x1xf32>
    %23 = vector.extract_strided_slice %0 {offsets = [0, 0], sizes = [4, 31], strides = [1, 1]} : vector<4x32xf32> to vector<4x31xf32>
    %24 = tpu.concatenate %22, %23 in 1 : vector<4x1xf32>, vector<4x31xf32> -> vector<4x32xf32>
    %cst_5 = arith.constant 0.000000e+00 : f32
    %25 = vector.shape_cast %19 : vector<1x32xi1> to vector<1x32xi1>
    %26 = vector.broadcast %25 : vector<1x32xi1> to vector<4x32xi1>
    %27 = vector.broadcast %cst_5 : f32 to vector<4x32xf32>
    %28 = arith.select %26, %24, %27 : vector<4x32xi1>, vector<4x32xf32>
    %29 = vector.extract_strided_slice %0 {offsets = [0, 1], sizes = [4, 31], strides = [1, 1]} : vector<4x32xf32> to vector<4x31xf32>
    %30 = tpu.concatenate %29, %22 in 1 : vector<4x31xf32>, vector<4x1xf32> -> vector<4x32xf32>
    %cst_6 = arith.constant 0.000000e+00 : f32
    %31 = vector.shape_cast %21 : vector<1x32xi1> to vector<1x32xi1>
    %32 = vector.broadcast %31 : vector<1x32xi1> to vector<4x32xi1>
    %33 = vector.broadcast %cst_6 : f32 to vector<4x32xf32>
    %34 = arith.select %32, %30, %33 : vector<4x32xi1>, vector<4x32xf32>
    %35 = tpu.concatenate %28, %0, %34 in 0 : vector<4x32xf32>, vector<4x32xf32>, vector<4x32xf32> -> vector<12x32xf32>
    %36 = arith.truncf %35 : vector<12x32xf32> to vector<12x32xbf16>
    %c0_7 = arith.constant 0 : index
    %c0_8 = arith.constant 0 : index
    %c0_9 = arith.constant 0 : index
    %37 = vector.load %arg1[%c0_7, %c0_8, %c0_9] : memref<2x4x12xbf16, #tpu.memory_space<vmem>>, vector<1x4x12xbf16>
    %38 = vector.shape_cast %37 : vector<1x4x12xbf16> to vector<4x12xbf16>
    %cst_10 = arith.constant dense<0.000000e+00> : vector<4x32xf32>
    %39 = tpu.matmul %38, %36, %cst_10 {dimension_numbers = #tpu.dot_dimension_numbers<[1], [0], [0], [1], [0, 0, 1, 1], [], []>} : vector<4x12xbf16>, vector<12x32xbf16>, vector<4x32xf32> -> vector<4x32xf32>
    %cst_11 = arith.constant dense<0.000000e+00> : vector<4xf32>
    %40 = vector.multi_reduction <add>, %39, %cst_11 [1] : vector<4x32xf32> to vector<4xf32>
    %41 = vector.shape_cast %40 : vector<4xf32> to vector<4x1xf32>
    %42 = arith.mulf %39, %39 : vector<4x32xf32>
    %cst_12 = arith.constant dense<0.000000e+00> : vector<4xf32>
    %43 = vector.multi_reduction <add>, %42, %cst_12 [1] : vector<4x32xf32> to vector<4xf32>
    %44 = vector.shape_cast %43 : vector<4xf32> to vector<4x1xf32>
    %cst_13 = arith.constant 3.125000e-02 : f32
    %45 = vector.broadcast %cst_13 : f32 to vector<4x1xf32>
    %46 = arith.mulf %41, %45 : vector<4x1xf32>
    %cst_14 = arith.constant 3.125000e-02 : f32
    %47 = vector.broadcast %cst_14 : f32 to vector<4x1xf32>
    %48 = arith.mulf %44, %47 : vector<4x1xf32>
    %49 = arith.mulf %46, %46 : vector<4x1xf32>
    %50 = arith.subf %48, %49 : vector<4x1xf32>
    %c0_15 = arith.constant 0 : index
    %c0_16 = arith.constant 0 : index
    %51 = vector.load %arg2[%c0_15, %c0_16] : memref<4x4xf32, #tpu.memory_space<vmem>>, vector<4x1xf32>
    %c0_17 = arith.constant 0 : index
    %c1 = arith.constant 1 : index
    %52 = vector.load %arg2[%c0_17, %c1] : memref<4x4xf32, #tpu.memory_space<vmem>>, vector<4x1xf32>
    %cst_18 = arith.constant 9.99999974E-6 : f32
    %53 = vector.broadcast %cst_18 : f32 to vector<4x1xf32>
    %54 = arith.addf %50, %53 : vector<4x1xf32>
    %55 = math.rsqrt %54 : vector<4x1xf32>
    %56 = arith.mulf %55, %51 : vector<4x1xf32>
    %57 = vector.broadcast %46 : vector<4x1xf32> to vector<4x32xf32>
    %58 = arith.subf %39, %57 : vector<4x32xf32>
    %59 = vector.broadcast %56 : vector<4x1xf32> to vector<4x32xf32>
    %60 = arith.mulf %58, %59 : vector<4x32xf32>
    %61 = vector.broadcast %52 : vector<4x1xf32> to vector<4x32xf32>
    %62 = arith.addf %60, %61 : vector<4x32xf32>
    %cst_19 = arith.constant 0.000000e+00 : f32
    %63 = vector.broadcast %cst_19 : f32 to vector<4x32xf32>
    %64 = arith.cmpf oge, %62, %63 : vector<4x32xf32>
    %cst_20 = arith.constant 0.00999999977 : f32
    %65 = vector.broadcast %cst_20 : f32 to vector<4x32xf32>
    %66 = arith.mulf %65, %62 : vector<4x32xf32>
    %67 = arith.select %64, %62, %66 : vector<4x32xi1>, vector<4x32xf32>
    %68 = vector.extract_strided_slice %67 {offsets = [0, 0], sizes = [4, 31], strides = [1, 1]} : vector<4x32xf32> to vector<4x31xf32>
    %69 = tpu.concatenate %22, %68 in 1 : vector<4x1xf32>, vector<4x31xf32> -> vector<4x32xf32>
    %cst_21 = arith.constant 0.000000e+00 : f32
    %70 = vector.shape_cast %19 : vector<1x32xi1> to vector<1x32xi1>
    %71 = vector.broadcast %70 : vector<1x32xi1> to vector<4x32xi1>
    %72 = vector.broadcast %cst_21 : f32 to vector<4x32xf32>
    %73 = arith.select %71, %69, %72 : vector<4x32xi1>, vector<4x32xf32>
    %74 = vector.extract_strided_slice %67 {offsets = [0, 1], sizes = [4, 31], strides = [1, 1]} : vector<4x32xf32> to vector<4x31xf32>
    %75 = tpu.concatenate %74, %22 in 1 : vector<4x31xf32>, vector<4x1xf32> -> vector<4x32xf32>
    %cst_22 = arith.constant 0.000000e+00 : f32
    %76 = vector.shape_cast %21 : vector<1x32xi1> to vector<1x32xi1>
    %77 = vector.broadcast %76 : vector<1x32xi1> to vector<4x32xi1>
    %78 = vector.broadcast %cst_22 : f32 to vector<4x32xf32>
    %79 = arith.select %77, %75, %78 : vector<4x32xi1>, vector<4x32xf32>
    %80 = tpu.concatenate %73, %67, %79 in 0 : vector<4x32xf32>, vector<4x32xf32>, vector<4x32xf32> -> vector<12x32xf32>
    %81 = arith.truncf %80 : vector<12x32xf32> to vector<12x32xbf16>
    %c1_23 = arith.constant 1 : index
    %c0_24 = arith.constant 0 : index
    %c0_25 = arith.constant 0 : index
    %82 = vector.load %arg1[%c1_23, %c0_24, %c0_25] : memref<2x4x12xbf16, #tpu.memory_space<vmem>>, vector<1x4x12xbf16>
    %83 = vector.shape_cast %82 : vector<1x4x12xbf16> to vector<4x12xbf16>
    %cst_26 = arith.constant dense<0.000000e+00> : vector<4x32xf32>
    %84 = tpu.matmul %83, %81, %cst_26 {dimension_numbers = #tpu.dot_dimension_numbers<[1], [0], [0], [1], [0, 0, 1, 1], [], []>} : vector<4x12xbf16>, vector<12x32xbf16>, vector<4x32xf32> -> vector<4x32xf32>
    %cst_27 = arith.constant dense<0.000000e+00> : vector<4xf32>
    %85 = vector.multi_reduction <add>, %84, %cst_27 [1] : vector<4x32xf32> to vector<4xf32>
    %86 = vector.shape_cast %85 : vector<4xf32> to vector<4x1xf32>
    %87 = arith.mulf %84, %84 : vector<4x32xf32>
    %cst_28 = arith.constant dense<0.000000e+00> : vector<4xf32>
    %88 = vector.multi_reduction <add>, %87, %cst_28 [1] : vector<4x32xf32> to vector<4xf32>
    %89 = vector.shape_cast %88 : vector<4xf32> to vector<4x1xf32>
    %cst_29 = arith.constant 3.125000e-02 : f32
    %90 = vector.broadcast %cst_29 : f32 to vector<4x1xf32>
    %91 = arith.mulf %86, %90 : vector<4x1xf32>
    %cst_30 = arith.constant 3.125000e-02 : f32
    %92 = vector.broadcast %cst_30 : f32 to vector<4x1xf32>
    %93 = arith.mulf %89, %92 : vector<4x1xf32>
    %94 = arith.mulf %91, %91 : vector<4x1xf32>
    %95 = arith.subf %93, %94 : vector<4x1xf32>
    %c0_31 = arith.constant 0 : index
    %c2 = arith.constant 2 : index
    %96 = vector.load %arg2[%c0_31, %c2] : memref<4x4xf32, #tpu.memory_space<vmem>>, vector<4x1xf32>
    %c0_32 = arith.constant 0 : index
    %c3 = arith.constant 3 : index
    %97 = vector.load %arg2[%c0_32, %c3] : memref<4x4xf32, #tpu.memory_space<vmem>>, vector<4x1xf32>
    %cst_33 = arith.constant 9.99999974E-6 : f32
    %98 = vector.broadcast %cst_33 : f32 to vector<4x1xf32>
    %99 = arith.addf %95, %98 : vector<4x1xf32>
    %100 = math.rsqrt %99 : vector<4x1xf32>
    %101 = arith.mulf %100, %96 : vector<4x1xf32>
    %102 = vector.broadcast %91 : vector<4x1xf32> to vector<4x32xf32>
    %103 = arith.subf %84, %102 : vector<4x32xf32>
    %104 = vector.broadcast %101 : vector<4x1xf32> to vector<4x32xf32>
    %105 = arith.mulf %103, %104 : vector<4x32xf32>
    %106 = vector.broadcast %97 : vector<4x1xf32> to vector<4x32xf32>
    %107 = arith.addf %105, %106 : vector<4x32xf32>
    %108 = arith.addf %0, %107 : vector<4x32xf32>
    %cst_34 = arith.constant 0.000000e+00 : f32
    %109 = vector.broadcast %cst_34 : f32 to vector<4x32xf32>
    %110 = arith.cmpf oge, %108, %109 : vector<4x32xf32>
    %cst_35 = arith.constant 0.00999999977 : f32
    %111 = vector.broadcast %cst_35 : f32 to vector<4x32xf32>
    %112 = arith.mulf %111, %108 : vector<4x32xf32>
    %113 = arith.select %110, %108, %112 : vector<4x32xi1>, vector<4x32xf32>
    %c0_36 = arith.constant 0 : index
    %c0_37 = arith.constant 0 : index
    %114 = vector.load %arg3[%c0_36, %c0_37] : memref<4x32xf32, #tpu.memory_space<vmem>>, vector<4x32xf32>
    tpu.vector_store %arg3[%c0_36, %c0_37], %113 {strides = array<i32>} : memref<4x32xf32, #tpu.memory_space<vmem>>, vector<4x32xf32>,
    return
  }
}

</mosaic_0001>

<llo_original>
// kernel: tpu_custom_call.1
$region0: #{tpu_custom_call.1}
  #allocation0 [shape = 'u32[]', space=smem, size = 0x4, offset = 0x4, fixed_abs, tag = 'smem constant byte address 0x4 - core index']
  #allocation1 [shape = 'u32[144,128]{1,0:T(1,128)}', space=vmem, size = 0x12000, scoped, tag = 'internal scratch']
  %s0 = inlined_call_operand.hbm [shape: f32[4,32], index: 0, kind: input, shape index: {}]
  %s1 = inlined_call_operand.hbm [shape: bf16[2,4,12], index: 1, kind: input, shape index: {}]
  %s2 = inlined_call_operand.hbm [shape: f32[4,4], index: 2, kind: input, shape index: {}]
  %s3 = inlined_call_operand.hbm [shape: f32[4,32], index: 3, kind: output, shape index: {}]
  %s4 = sld [smem:[#allocation0]]
  $region34: #{tpu_custom_call.1} parent=0
    _
  %s6 = ssub.s32 1, %s4
  %s7 = scalar_select 0, %s6, %s4
  $region1: #{tpu_custom_call.1} parent=0
    #allocation2 [shape = 'u8[2048]{0}', space=vmem, size = 0x800, scoped, tag = 'input window, operand 0, single buffered']
    #allocation3 [shape = 's32[1]{0}', space=sflag, size = 0x4, scoped, tag = 'scoped memory for tpu_custom_call.1']
    #allocation4 [shape = 's32[1]{0}', space=sflag, size = 0x4, scoped, tag = 'scoped memory for tpu_custom_call.1']
    #allocation5 [shape = 'u8[2048]{0}', space=vmem, size = 0x800, scoped, tag = 'input window, operand 1, single buffered']
    #allocation6 [shape = 's32[1]{0}', space=sflag, size = 0x4, scoped, tag = 'scoped memory for tpu_custom_call.1']
    #allocation7 [shape = 'u8[2048]{0}', space=vmem, size = 0x800, scoped, tag = 'input window, operand 2, single buffered']
    #allocation8 [shape = 'u8[2048]{0}', space=vmem, size = 0x800, scoped, tag = 'output window, operand 0, single buffered']
    %8 = vsyncpa [#allocation3], 0
    %9 = vsyncpa [#allocation6], 0
    %10 = vsyncpa [#allocation4], 0
    // Predicated region
    $region2: #{tpu_custom_call.1} parent=1 // pred_check
      _
    $region3: #{tpu_custom_call.1} parent=1 // pred_check_branch
      %12 = sbr.rel (0) target = $region5
    $region4: #{tpu_custom_call.1} parent=1 // pred_region
      %s14 = ssub.s32 64, 64
      %15 = vsyncadd [#allocation3], %s14
      %s17 = sshll.u32 [#allocation2], 4
      %s18 = int_to_ptr.vmem [resolvable:$true] %s17
      %20 = dma.hbm_to_vmem [thread:$0]  %s0, 64, %s18, [#allocation3]
    $region5: #{tpu_custom_call.1} parent=1 // pred_fallthru
      _
    // Predicated region
    $region6: #{tpu_custom_call.1} parent=1 // pred_check
      _
    $region7: #{tpu_custom_call.1} parent=1 // pred_check_branch
      %22 = sbr.rel (0) target = $region9
    $region8: #{tpu_custom_call.1} parent=1 // pred_region
      %s24 = ssub.s32 64, 64
      %25 = vsyncadd [#allocation6], %s24
      %s26 = sshll.u32 [#allocation5], 4
      %s27 = int_to_ptr.vmem [resolvable:$true] %s26
      %32 = dma.hbm_to_vmem [thread:$0]  %s1, 64, %s27, [#allocation6], 32, 32, 2
    $region9: #{tpu_custom_call.1} parent=1 // pred_fallthru
      _
    // Predicated region
    $region10: #{tpu_custom_call.1} parent=1 // pred_check
      _
    $region11: #{tpu_custom_call.1} parent=1 // pred_check_branch
      %34 = sbr.rel (0) target = $region13
    $region12: #{tpu_custom_call.1} parent=1 // pred_region
      %s36 = ssub.s32 64, 64
      %37 = vsyncadd [#allocation6], %s36
      %s39 = sshll.u32 [#allocation7], 4
      %s40 = int_to_ptr.vmem [resolvable:$true] %s39
      %42 = dma.hbm_to_vmem [thread:$0]  %s2, 64, %s40, [#allocation6]
    $region13: #{tpu_custom_call.1} parent=1 // pred_fallthru
      _
    // Predicated region
    $region14: #{tpu_custom_call.1} parent=1 // pred_check
      _
    $region15: #{tpu_custom_call.1} parent=1 // pred_check_branch
      %44 = sbr.rel (0) target = $region17
    $region16: #{tpu_custom_call.1} parent=1 // pred_region
      %45 = dma.done [#allocation3], 64
    $region17: #{tpu_custom_call.1} parent=1 // pred_fallthru
      _
    // Predicated region
    $region18: #{tpu_custom_call.1} parent=1 // pred_check
      _
    $region19: #{tpu_custom_call.1} parent=1 // pred_check_branch
      %47 = sbr.rel (0) target = $region21
    $region20: #{tpu_custom_call.1} parent=1 // pred_region
      %48 = dma.done [#allocation6], 64
    $region21: #{tpu_custom_call.1} parent=1 // pred_fallthru
      _
    // Predicated region
    $region22: #{tpu_custom_call.1} parent=1 // pred_check
      _
    $region23: #{tpu_custom_call.1} parent=1 // pred_check_branch
      %50 = sbr.rel (0) target = $region25
    $region24: #{tpu_custom_call.1} parent=1 // pred_region
      %51 = dma.done [#allocation6], 64
    $region25: #{tpu_custom_call.1} parent=1 // pred_fallthru
      _
    %v53 = vld [vmem:[#allocation2] sm:$0xf]
    %v54 = vlaneseq
    %v55 = vand.u32 %v54, 127
    %vm56 = vcmp.lt.s32.totalorder %v55, 0
    %v57 = vsub.s32 0, %v55
    %v58 = vsel %vm56, %v57, %v55
    %v59 = vshrl.u32 %v58, 4
    %v60 = vand.u32 %v58, 15
    %v61 = vsub.s32 0, %v60
    %v62 = vsel %vm56, %v61, %v60
    %vm63 = vcmp.ne.s32.totalorder %v62, 0
    %vm64 = vcmp.lt.s32.totalorder %v62, 0
    %vm65 = vmand %vm64, %vm63
    %v66 = vadd.s32 %v62, 16
    %v67 = vsel %vm65, %v66, %v62
    %vm68 = vcmp.ne.s32.totalorder %v67, 0
    %vm69 = vcmp.ne.s32.totalorder %v67, 15
    %71 = vrot.lane.b32.xlu0 %v53, 1
    %v72 = vpop.permute.xlu0 %71
    %vm74 = vcmask 7168
    %v75 = vsel %vm74, 0.0, %v72
    %v76 = vsel %vm68, 1, 0
    %vm77 = vcmp.eq.s32.totalorder %v76, 1
    %v78 = vsel %vm77, %v75, 0.0
    %79 = vrot.lane.b32.xlu0 %v53, 127
    %v80 = vpop.permute.xlu0 %79
    %vm82 = vcmask 252928
    %v83 = vsel %vm82, %v80, 0.0
    %v84 = vsel %vm69, 1, 0
    %vm85 = vcmp.eq.s32.totalorder %v84, 1
    %v86 = vsel %vm85, %v83, 0.0
    %v87 = vrot.slane %v53, 4
    %vm89 = vcmask 1043456
    %v90 = vsel %vm89, %v78, %v87
    %v91 = vpack.c.bf16 %v86, %v90
    %v92 = vld [vmem:[#allocation5] sm:$0x3]
    %vm93 = vcmask 97280
    %v95 = vsel %vm93, %v92, 0
    %vm97 = vcmask 1045504
    %v99 = vsel %vm97, %v91, 0
    %101 = vmatprep.subr.bf16.mxu0 0
    %102 = vmatpush1.bf16.msra.mxu0 0
    %103 = vmatprep.subr.bf16.mxu0 0
    %104 = vmatpush1.bf16.msra.mxu0 0
    %105 = vmatprep.subr.bf16.mxu0 0
    %106 = vmatpush1.bf16.msra.mxu0 0
    %107 = vmatprep.subr.bf16.mxu0 0
    %108 = vmatpush1.bf16.msra.mxu0 0
    %109 = vmatprep.subr.bf16.mxu0 0
    %110 = vmatpush1.bf16.msra.mxu0 0
    %111 = vmatprep.subr.bf16.mxu0 0
    %112 = vmatpush1.bf16.msra.mxu0 0
    %113 = vmatprep.subr.bf16.mxu0 0
    %114 = vmatpush1.bf16.msra.mxu0 0
    %115 = vmatprep.subr.bf16.mxu0 0
    %116 = vmatpush1.bf16.msra.mxu0 %v99
    %117 = vmatprep.subr.bf16.mxu0 0
    %118 = vmatpush2.bf16.msra.mxu0 0
    %119 = vmatprep.subr.bf16.mxu0 0
    %120 = vmatpush2.bf16.msra.mxu0 0
    %121 = vmatprep.subr.bf16.mxu0 0
    %122 = vmatpush2.bf16.msra.mxu0 0
    %123 = vmatprep.subr.bf16.mxu0 0
    %124 = vmatpush2.bf16.msra.mxu0 0
    %125 = vmatprep.subr.bf16.mxu0 0
    %126 = vmatpush2.bf16.msra.mxu0 0
    %127 = vmatprep.subr.bf16.mxu0 0
    %128 = vmatpush2.bf16.msra.mxu0 0
    %129 = vmatprep.subr.bf16.mxu0 0
    %130 = vmatpush2.bf16.msra.mxu0 0
    %131 = vmatprep.subr.bf16.mxu0 0
    %132 = vmatpush2.bf16.msra.mxu0 0
    %133 = vmatprep.mubr.bf16.mxu0 0
    %134 = vmatmul.mubr.bf16.gmra.mxu0 %v95
    %v135 = vpop.f32.mrf.mxu0
    %v136 = vadd.f32 0.0, %v135
    %v137 = vpop.f32.mrf.mxu0
    %v138 = vpop.f32.mrf.mxu0
    %v139 = vpop.f32.mrf.mxu0
    %140 = vdwg.mxu0
    %vm141 = vcmask 257024
    %v142 = vsel %vm141, %v136, 0.0
    %143 = vadd.xlane.f32.xlu0 %v142
    %v144 = vpop.xlane.xlu0 %143
    %v145 = vmul.f32 %v136, %v136
    %v146 = vsel %vm141, %v145, 0.0
    %147 = vadd.xlane.f32.xlu0 %v146
    %v148 = vpop.xlane.xlu0 %147
    %v149 = vmul.f32 %v144, 0.03125
    %v150 = vmul.f32 %v148, 0.03125
    %v151 = vmul.f32 %v149, %v149
    %v152 = vsub.f32 %v150, %v151
    %v153 = vld [vmem:[#allocation7] sm:$0xf]
    %v154 = vadd.f32 %v152, 1e-05
    %v155 = vrsqrt.pop %v154
    %v156 = vmul.f32 %v155, %v153
    %v157 = vsub.f32 %v136, %v149
    %159 = vset.pattern.permute.xlu0 0
    %160 = vperm.xlu0 %159, %v156
    %v161 = vpop.permute.xlu0 %160
    %v163 = vmul.f32 %v157, %v161
    %165 = vset.pattern.permute.xlu0 1
    %166 = vperm.xlu0 %165, %v153
    %v167 = vpop.permute.xlu0 %166
    %v169 = vadd.f32 %v163, %v167
    %vm170 = vcmp.ge.f32.partialorder %v169, 0.0
    %v171 = vmul.f32 %v169, 0.01
    %v172 = vsel %vm170, %v169, %v171
    %174 = vrot.lane.b32.xlu0 %v172, 1
    %v175 = vpop.permute.xlu0 %174
    %v177 = vsel %vm74, 0.0, %v175
    %v178 = vsel %vm77, %v177, 0.0
    %179 = vrot.lane.b32.xlu0 %v172, 127
    %v180 = vpop.permute.xlu0 %179
    %v182 = vsel %vm82, %v180, 0.0
    %v183 = vsel %vm85, %v182, 0.0
    %v184 = vrot.slane %v172, 4
    %v186 = vsel %vm89, %v178, %v184
    %v187 = vpack.c.bf16 %v183, %v186
    %s188 = scalar_lea.vmem [#allocation5], 2
    %v189 = vld [vmem:[%s188] sm:$0x3]
    %v191 = vsel %vm93, %v189, 0
    %v194 = vsel %vm97, %v187, 0
    %196 = vmatprep.subr.bf16.mxu0 0
    %197 = vmatpush1.bf16.msra.mxu0 0
    %198 = vmatprep.subr.bf16.mxu0 0
    %199 = vmatpush1.bf16.msra.mxu0 0
    %200 = vmatprep.subr.bf16.mxu0 0
    %201 = vmatpush1.bf16.msra.mxu0 0
    %202 = vmatprep.subr.bf16.mxu0 0
    %203 = vmatpush1.bf16.msra.mxu0 0
    %204 = vmatprep.subr.bf16.mxu0 0
    %205 = vmatpush1.bf16.msra.mxu0 0
    %206 = vmatprep.subr.bf16.mxu0 0
    %207 = vmatpush1.bf16.msra.mxu0 0
    %208 = vmatprep.subr.bf16.mxu0 0
    %209 = vmatpush1.bf16.msra.mxu0 0
    %210 = vmatprep.subr.bf16.mxu0 0
    %211 = vmatpush1.bf16.msra.mxu0 %v194
    %212 = vmatprep.subr.bf16.mxu0 0
    %213 = vmatpush2.bf16.msra.mxu0 0
    %214 = vmatprep.subr.bf16.mxu0 0
    %215 = vmatpush2.bf16.msra.mxu0 0
    %216 = vmatprep.subr.bf16.mxu0 0
    %217 = vmatpush2.bf16.msra.mxu0 0
    %218 = vmatprep.subr.bf16.mxu0 0
    %219 = vmatpush2.bf16.msra.mxu0 0
    %220 = vmatprep.subr.bf16.mxu0 0
    %221 = vmatpush2.bf16.msra.mxu0 0
    %222 = vmatprep.subr.bf16.mxu0 0
    %223 = vmatpush2.bf16.msra.mxu0 0
    %224 = vmatprep.subr.bf16.mxu0 0
    %225 = vmatpush2.bf16.msra.mxu0 0
    %226 = vmatprep.subr.bf16.mxu0 0
    %227 = vmatpush2.bf16.msra.mxu0 0
    %228 = vmatprep.mubr.bf16.mxu0 0
    %229 = vmatmul.mubr.bf16.gmra.mxu0 %v191
    %v230 = vpop.f32.mrf.mxu0
    %v231 = vadd.f32 0.0, %v230
    %v232 = vpop.f32.mrf.mxu0
    %v233 = vpop.f32.mrf.mxu0
    %v234 = vpop.f32.mrf.mxu0
    %235 = vdwg.mxu0
    %v236 = vsel %vm141, %v231, 0.0
    %237 = vadd.xlane.f32.xlu0 %v236
    %v238 = vpop.xlane.xlu0 %237
    %v239 = vmul.f32 %v231, %v231
    %v240 = vsel %vm141, %v239, 0.0
    %241 = vadd.xlane.f32.xlu0 %v240
    %v242 = vpop.xlane.xlu0 %241
    %v243 = vmul.f32 %v238, 0.03125
    %v244 = vmul.f32 %v242, 0.03125
    %v245 = vmul.f32 %v243, %v243
    %v246 = vsub.f32 %v244, %v245
    %v247 = vadd.f32 %v246, 1e-05
    %v248 = vrsqrt.pop %v247
    %v249 = vmul.f32 %v248, %v153
    %v250 = vsub.f32 %v231, %v243
    %252 = vset.pattern.permute.xlu0 2
    %253 = vperm.xlu0 %252, %v249
    %v254 = vpop.permute.xlu0 %253
    %v256 = vmul.f32 %v250, %v254
    %257 = vset.pattern.permute.xlu0 3
    %258 = vperm.xlu0 %257, %v153
    %v259 = vpop.permute.xlu0 %258
    %v261 = vadd.f32 %v256, %v259
    %v262 = vadd.f32 %v53, %v261
    %vm263 = vcmp.ge.f32.partialorder %v262, 0.0
    %v264 = vmul.f32 %v262, 0.01
    %v265 = vsel %vm263, %v262, %v264
    %266 = vst.msk [vmem:[#allocation8] sm:$0xf] %vm141, %v265
    // Predicated region
    $region26: #{tpu_custom_call.1} parent=1 // pred_check
      _
    $region27: #{tpu_custom_call.1} parent=1 // pred_check_branch
      %268 = sbr.rel (0) target = $region29
    $region28: #{tpu_custom_call.1} parent=1 // pred_region
      %s270 = ssub.s32 64, 64
      %271 = vsyncadd [#allocation4], %s270
      %s273 = sshll.u32 [#allocation8], 4
      %s274 = int_to_ptr.vmem [resolvable:$true] %s273
      %276 = dma.vmem_to_hbm [thread:$0]  %s274, 64, %s3, [#allocation4]
    $region29: #{tpu_custom_call.1} parent=1 // pred_fallthru
      _
    // Predicated region
    $region30: #{tpu_custom_call.1} parent=1 // pred_check
      _
    $region31: #{tpu_custom_call.1} parent=1 // pred_check_branch
      %278 = sbr.rel (0) target = $region33
    $region32: #{tpu_custom_call.1} parent=1 // pred_region
      %279 = dma.done [#allocation4], 64
    $region33: #{tpu_custom_call.1} parent=1 // pred_fallthru
      _
    %280 = vsyncpa [#allocation3], 1
    %281 = vsyncpa [#allocation6], 1
    %282 = vsyncpa [#allocation4], 1

</llo_original>
